<compile_context>
chip_gen: v7x
topology: tpu7x:2x2x1
jax: 0.10.0
libtpu: 0.0.40
codegen_flags: <defaults>
</compile_context>

<pallas_src>
import jax
import jax.numpy as jnp
import numpy as np
from jax.experimental import pallas as pl
from jax.experimental.pallas import tpu as pltpu

_EPS = 1e-5  # nn.InstanceNorm2d default eps (affine=False, track_running_stats=False)


# --------------------------------------------------------------------------- kernel
def _make_kernel(L, compute_dtype):
    """L = t_h * W : flattened spatial length of one row-chunk."""

    def kernel(x0_ref, x1_ref, edge_ref, wtap_ref, w1_ref, z_ref, stats_ref, slab_ref):
        # x0_ref  : (1, C, L)   rows [k*t_h, (k+1)*t_h) of x, spatially flattened, f32
        # x1_ref  : (1, C, L)   same rows of the row-shifted copy (x[a+1]), f32
        # edge_ref: (1, L)      1.0 except 0.0 where column b == W-1
        # wtap_ref: (C, 9)      per-channel sub-pixel tap weights, f32
        # w1_ref  : (BCo, C)    1x1-conv weight block, compute dtype (bf16 by default)
        # z_ref   : (1, 1, BCo, 4*L)  f32 un-normalized 1x1-conv output (phase-major)
        # stats_ref:(1, 1, BCo, 2)    f32 per-chunk [sum, sum-of-squares]
        # slab_ref: (C, 4*L)    VMEM scratch holding the 4 lane-concatenated phases
        edge = edge_ref[...]                               # (1, L)

        x00 = x0_ref[0]                                    # x[a,   b]     (C, L)
        x10 = x1_ref[0]                                    # x[a+1, b]
        # b+1 columns: cyclic lane roll by one, right edge masked to zero.
        x01 = pltpu.roll(x00, L - 1, 1) * edge             # x[a,   b+1]
        x11 = pltpu.roll(x10, L - 1, 1) * edge             # x[a+1, b+1]

        def tap(j):
            return wtap_ref[:, j:j + 1]                    # (C, 1) broadcast over lanes

        # Depthwise ConvTranspose2d(k=3, s=2, p=1, op=1) via phase decomposition
        # (VPU math in f32; cast to the matmul compute dtype on the slab store).
        cdt = compute_dtype
        slab_ref[:, 0 * L:1 * L] = (x00 * tap(0)).astype(cdt)                    # (even,even)
        slab_ref[:, 1 * L:2 * L] = (x00 * tap(1) + x01 * tap(2)).astype(cdt)     # (even,odd)
        slab_ref[:, 2 * L:3 * L] = (x00 * tap(3) + x10 * tap(4)).astype(cdt)     # (odd, even)
        slab_ref[:, 3 * L:4 * L] = (x00 * tap(5) + x01 * tap(6)
                                    + x10 * tap(7) + x11 * tap(8)).astype(cdt)   # (odd, odd)

        # Single fused 1x1 channel mix on the MXU, f32 accumulation.
        z = jnp.dot(w1_ref[...], slab_ref[...], preferred_element_type=jnp.float32)
        z_ref[0, 0] = z                                    # dense (BCo, 4*L) store

        # Per-chunk InstanceNorm partial statistics (finalized in the wrapper).
        stats_ref[0, 0, :, 0:1] = jnp.sum(z, axis=1, keepdims=True)
        stats_ref[0, 0, :, 1:2] = jnp.sum(z * z, axis=1, keepdims=True)

    return kernel


# ----------------------------------------------------------------------- host helpers
def _vmem_capacity_bytes():
    try:
        info = pltpu.get_tpu_info()
        for attr in ("vmem_capacity_bytes", "vmem_bytes", "vmem_size_bytes"):
            v = getattr(info, attr, None)
            if v:
                return int(v)
    except Exception:
        pass
    return 64 * 1024 * 1024          # conservative (v7x-sized) fallback


def _pick_block_co(Co):
    if Co <= 256:
        return Co
    kind = ""
    try:
        kind = jax.devices()[0].device_kind.lower()
    except Exception:
        pass
    pref = 256 if "v6" in kind else 128      # v6e MXU M-dim likes 256; v5e/v7x 128
    for b in (pref, 384 - pref):             # (pref, the other one)
        if Co % b == 0:
            return b
    return pref                              # falls back to zero-padding Co


def _pick_t_h(H, W, C, block_co, itemsize_c, budget):
    """Largest row-chunk t_h (dividing H, lane-legal) whose VMEM footprint fits."""
    cands = [t for t in range(1, H + 1)
             if H % t == 0 and (t == H or (t * W) % 128 == 0)]
    cands.sort(reverse=True)
    chosen = cands[-1]                       # fallback: smallest legal chunk
    for t in cands:
        L = t * W
        foot = (2 * 2 * C * L * 4            # x0 + x1 blocks, double-buffered
                + 2 * L * 4                  # edge mask
                + 2 * C * 9 * 4              # taps
                + 2 * block_co * C * itemsize_c      # w1 block
                + C * 4 * L * itemsize_c             # phase slab scratch
                + 2 * block_co * 4 * L * 4           # z output block, double-buffered
                + 2 * block_co * 128 * 4)            # stats (lane-padded)
        if foot <= budget:
            chosen = t
            break
    return chosen


# --------------------------------------------------------------------------- wrapper
def upblock_dws_forward(x, wdw, bdw, w1, b1, *, compute_dtype=jnp.bfloat16):
    """x: (N, C, H, W) f32.  wdw: (C, 1, 3, 3) ConvTranspose2d weight.  bdw: (C,).
    w1: (Co, C) 1x1 Conv2d weight (kernel dims squeezed).  b1: (Co,).
    Both biases cancel exactly under InstanceNorm(affine=False) and are unused.
    compute_dtype: matmul-operand dtype (bf16 default; f32 for bit-exact checks)."""
    del bdw, b1                                   # exact no-ops under InstanceNorm
    N, C, H, W = x.shape
    Co = w1.shape[0]
    HW = H * W

    # ---- per-chip sizing -----------------------------------------------------------
    vmem_cap = _vmem_capacity_bytes()
    block_co = _pick_block_co(Co)
    Co_pad = ((Co + block_co - 1) // block_co) * block_co
    nco = Co_pad // block_co
    itemsize_c = jnp.dtype(compute_dtype).itemsize
    t_h = _pick_t_h(H, W, C, block_co, itemsize_c, budget=int(vmem_cap * 0.55))
    L = t_h * W
    nhc = H // t_h

    # ---- host-side operand prep ------------------------------------------------------
    # Per-channel sub-pixel tap table (C, 9) for ConvTranspose2d(k=3,s=2,p=1,op=1):
    #   y[2a,2b]     = w[1,1] x[a,b]
    #   y[2a,2b+1]   = w[1,2] x[a,b] + w[1,0] x[a,b+1]
    #   y[2a+1,2b]   = w[2,1] x[a,b] + w[0,1] x[a+1,b]
    #   y[2a+1,2b+1] = w[2,2] x[a,b] + w[2,0] x[a,b+1] + w[0,2] x[a+1,b] + w[0,0] x[a+1,b+1]
    w = wdw[:, 0].astype(jnp.float32)             # (C, 3, 3)
    wtaps = jnp.stack(
        [w[:, 1, 1],
         w[:, 1, 2], w[:, 1, 0],
         w[:, 2, 1], w[:, 0, 1],
         w[:, 2, 2], w[:, 2, 0], w[:, 0, 2], w[:, 0, 0]],
        axis=1)                                   # (C, 9)

    xf = x.astype(jnp.float32)
    x0 = xf.reshape(N, C, HW)                                             # x[a]
    x1 = jnp.pad(xf[:, :, 1:, :], ((0, 0), (0, 0), (0, 1), (0, 0)))       # x[a+1], last row 0
    x1 = x1.reshape(N, C, HW)

    # Right-edge column mask (0 where b == W-1); chunks are whole rows so one chunk's
    # worth (length L) serves every chunk.
    edge = (jnp.arange(L, dtype=jnp.int32) % W != (W - 1)).astype(jnp.float32)
    edge = edge.reshape(1, L)

    w1m = w1.astype(compute_dtype)
    if Co_pad != Co:
        w1m = jnp.pad(w1m, ((0, Co_pad - Co), (0, 0)))

    # ---- pallas call -----------------------------------------------------------------
    z_out, stats = pl.pallas_call(
        _make_kernel(L, compute_dtype),
        out_shape=(jax.ShapeDtypeStruct((N, nhc, Co_pad, 4 * L), jnp.float32),
                   jax.ShapeDtypeStruct((N, nhc, Co_pad, 2), jnp.float32)),
        grid=(N, nco, nhc),
        in_specs=[
            pl.BlockSpec((1, C, L), lambda n, j, k: (n, 0, k)),       # x rows a
            pl.BlockSpec((1, C, L), lambda n, j, k: (n, 0, k)),       # x rows a+1
            pl.BlockSpec((1, L), lambda n, j, k: (0, 0)),             # edge mask
            pl.BlockSpec((C, 9), lambda n, j, k: (0, 0)),             # tap weights
            pl.BlockSpec((block_co, C), lambda n, j, k: (j, 0)),      # 1x1 weight block
        ],
        out_specs=(
            pl.BlockSpec((1, 1, block_co, 4 * L), lambda n, j, k: (n, k, j, 0)),
            pl.BlockSpec((1, 1, block_co, 2), lambda n, j, k: (n, k, j, 0)),
        ),
        scratch_shapes=[pltpu.VMEM((C, 4 * L), compute_dtype)],
        compiler_params=pltpu.CompilerParams(
            dimension_semantics=("parallel", "parallel", "parallel"),
            vmem_limit_bytes=int(vmem_cap * 0.8)),
    )(x0, x1, edge, wtaps, w1m)

    # ---- InstanceNorm finalize + ReLU, fused by XLA into the phase->NCHW interleave ---
    z_out = z_out[:, :, :Co, :]                               # (N, nhc, Co, 4*L)
    s = stats[:, :, :Co, :].sum(axis=1)                       # (N, Co, 2)
    inv_n = 1.0 / float(4 * HW)                               # Ho*Wo = 4*H*W per channel
    mean = s[..., 0] * inv_n
    var = jnp.maximum(s[..., 1] * inv_n - mean * mean, 0.0)
    scale = jax.lax.rsqrt(var + _EPS)
    zn = (z_out - mean[:, None, :, None]) * scale[:, None, :, None]
    y = jnp.maximum(zn, 0.0)
    out = (y.reshape(N, nhc, Co, 2, 2, t_h, W)
             .transpose(0, 2, 1, 5, 3, 6, 4)                  # (N, Co, nhc, a, pr, b, pc)
             .reshape(N, Co, 2 * H, 2 * W))
    return out


# ------------------------------------------------------------------------- reference
def ref_forward(x, wdw, bdw, w1, b1):
    """Pure-JAX reference mirroring the PyTorch module semantics (biases included)."""
    N, C, H, W = x.shape
    Co = w1.shape[0]
    wflip = wdw[:, :, ::-1, ::-1]                             # (C, 1, 3, 3)
    y = jax.lax.conv_general_dilated(
        x, wflip,
        window_strides=(1, 1),
        padding=((1, 2), (1, 2)),
        lhs_dilation=(2, 2),
        dimension_numbers=("NCHW", "OIHW", "NCHW"),
        feature_group_count=C,
    )
    y = y + bdw.reshape(1, C, 1, 1)
    z = jnp.einsum("nchw,oc->nohw", y, w1) + b1.reshape(1, Co, 1, 1)
    mean = z.mean(axis=(2, 3), keepdims=True)
    var = ((z - mean) ** 2).mean(axis=(2, 3), keepdims=True)
    zn = (z - mean) / jnp.sqrt(var + _EPS)
    return jnp.maximum(zn, 0.0)


if __name__ == "__main__":
    key = jax.random.PRNGKey(0)
    k1, k2, k3, k4, k5 = jax.random.split(key, 5)

    N, C, H, W = 2, 4, 16, 16        # small synthetic shapes
    Co = 8                           # output_channels (kept small)

    x = jax.random.normal(k1, (N, C, H, W), jnp.float32)
    # ConvTranspose2d(C, C, 3, groups=C) weight: (in_channels, out_channels/groups, 3, 3)
    wdw = jax.random.normal(k2, (C, 1, 3, 3), jnp.float32) * 0.2
    bdw = jax.random.normal(k3, (C,), jnp.float32) * 0.1
    # Conv2d(C, Co, 1) weight squeezed to (Co, C)
    w1 = jax.random.normal(k4, (Co, C), jnp.float32) * 0.2
    b1 = jax.random.normal(k5, (Co,), jnp.float32) * 0.1

    ref = jax.block_until_ready(ref_forward(x, wdw, bdw, w1, b1))

    # Exact-algorithm check: f32 matmul operands.
    out_f32 = jax.block_until_ready(
        upblock_dws_forward(x, wdw, bdw, w1, b1, compute_dtype=jnp.float32))
    np.testing.assert_allclose(np.asarray(out_f32), np.asarray(ref), atol=2e-4, rtol=2e-4)

    # Default (performance) path: bf16 matmul operands, f32 accumulation / stats.
    out_bf16 = jax.block_until_ready(upblock_dws_forward(x, wdw, bdw, w1, b1))
    np.testing.assert_allclose(np.asarray(out_bf16), np.asarray(ref), atol=5e-2, rtol=5e-2)

    print("KERNEL_OK")
</pallas_src>

<mosaic_0001>
module attributes {stable_mosaic.version = 11 : i64} {
  func.func @kernel(%arg0: i32, %arg1: i32, %arg2: i32, %arg3: memref<1x4x256xf32, #tpu.memory_space<vmem>>, %arg4: memref<1x4x256xf32, #tpu.memory_space<vmem>>, %arg5: memref<1x256xf32, #tpu.memory_space<vmem>>, %arg6: memref<4x9xf32, #tpu.memory_space<vmem>>, %arg7: memref<8x4xf32, #tpu.memory_space<vmem>>, %arg8: memref<1x1x8x1024xf32, #tpu.memory_space<vmem>>, %arg9: memref<1x1x8x2xf32, #tpu.memory_space<vmem>>, %arg10: memref<4x1024xf32, #tpu.memory_space<vmem>>) attributes {dimension_semantics = [#tpu.dimension_semantics<parallel>, #tpu.dimension_semantics<parallel>, #tpu.dimension_semantics<parallel>], iteration_bounds = array<i64: 2, 1, 1>, scalar_prefetch = 0 : i64, scratch_operands = 1 : i64, tpu.core_type = #tpu.core_type<tc>, window_params = [{transform_indices = @transform_0, window_bounds = array<i64: 1, 4, 256>}, {transform_indices = @transform_1, window_bounds = array<i64: 1, 4, 256>}, {pipeline_mode = #tpu.pipeline_mode<synchronous>, transform_indices = @transform_2, window_bounds = array<i64: 1, 256>}, {pipeline_mode = #tpu.pipeline_mode<synchronous>, transform_indices = @transform_3, window_bounds = array<i64: 4, 9>}, {transform_indices = @transform_4, window_bounds = array<i64: 8, 4>}, {transform_indices = @transform_5, window_bounds = array<i64: 1, 1, 8, 1024>}, {transform_indices = @transform_6, window_bounds = array<i64: 1, 1, 8, 2>}]} {
    %c0 = arith.constant 0 : index
    %c0_0 = arith.constant 0 : index
    %0 = vector.load %arg5[%c0, %c0_0] : memref<1x256xf32, #tpu.memory_space<vmem>>, vector<1x256xf32>
    %c0_1 = arith.constant 0 : index
    %c0_2 = arith.constant 0 : index
    %c0_3 = arith.constant 0 : index
    %1 = vector.load %arg3[%c0_1, %c0_2, %c0_3] : memref<1x4x256xf32, #tpu.memory_space<vmem>>, vector<1x4x256xf32>
    %2 = vector.shape_cast %1 : vector<1x4x256xf32> to vector<4x256xf32>
    %c0_4 = arith.constant 0 : index
    %c0_5 = arith.constant 0 : index
    %c0_6 = arith.constant 0 : index
    %3 = vector.load %arg4[%c0_4, %c0_5, %c0_6] : memref<1x4x256xf32, #tpu.memory_space<vmem>>, vector<1x4x256xf32>
    %4 = vector.shape_cast %3 : vector<1x4x256xf32> to vector<4x256xf32>
    %c255_i32 = arith.constant 255 : i32
    %5 = tpu.dynamic_rotate %2 by %c255_i32 dim 1 : vector<4x256xf32>, i32 -> vector<4x256xf32>
    %6 = vector.broadcast %0 : vector<1x256xf32> to vector<4x256xf32>
    %7 = arith.mulf %5, %6 : vector<4x256xf32>
    %c255_i32_7 = arith.constant 255 : i32
    %8 = tpu.dynamic_rotate %4 by %c255_i32_7 dim 1 : vector<4x256xf32>, i32 -> vector<4x256xf32>
    %9 = vector.broadcast %0 : vector<1x256xf32> to vector<4x256xf32>
    %10 = arith.mulf %8, %9 : vector<4x256xf32>
    %c0_8 = arith.constant 0 : index
    %c0_9 = arith.constant 0 : index
    %11 = vector.load %arg6[%c0_8, %c0_9] : memref<4x9xf32, #tpu.memory_space<vmem>>, vector<4x1xf32>
    %12 = vector.broadcast %11 : vector<4x1xf32> to vector<4x256xf32>
    %13 = arith.mulf %2, %12 : vector<4x256xf32>
    %c0_10 = arith.constant 0 : index
    %c0_11 = arith.constant 0 : index
    %14 = vector.load %arg10[%c0_10, %c0_11] : memref<4x1024xf32, #tpu.memory_space<vmem>>, vector<4x256xf32>
    tpu.vector_store %arg10[%c0_10, %c0_11], %13 {strides = array<i32>} : memref<4x1024xf32, #tpu.memory_space<vmem>>, vector<4x256xf32>,
    %c0_12 = arith.constant 0 : index
    %c1 = arith.constant 1 : index
    %15 = vector.load %arg6[%c0_12, %c1] : memref<4x9xf32, #tpu.memory_space<vmem>>, vector<4x1xf32>
    %16 = vector.broadcast %15 : vector<4x1xf32> to vector<4x256xf32>
    %17 = arith.mulf %2, %16 : vector<4x256xf32>
    %c0_13 = arith.constant 0 : index
    %c2 = arith.constant 2 : index
    %18 = vector.load %arg6[%c0_13, %c2] : memref<4x9xf32, #tpu.memory_space<vmem>>, vector<4x1xf32>
    %19 = vector.broadcast %18 : vector<4x1xf32> to vector<4x256xf32>
    %20 = arith.mulf %7, %19 : vector<4x256xf32>
    %21 = arith.addf %17, %20 : vector<4x256xf32>
    %c0_14 = arith.constant 0 : index
    %c256 = arith.constant 256 : index
    %22 = vector.load %arg10[%c0_14, %c256] : memref<4x1024xf32, #tpu.memory_space<vmem>>, vector<4x256xf32>
    tpu.vector_store %arg10[%c0_14, %c256], %21 {strides = array<i32>} : memref<4x1024xf32, #tpu.memory_space<vmem>>, vector<4x256xf32>,
    %c0_15 = arith.constant 0 : index
    %c3 = arith.constant 3 : index
    %23 = vector.load %arg6[%c0_15, %c3] : memref<4x9xf32, #tpu.memory_space<vmem>>, vector<4x1xf32>
    %24 = vector.broadcast %23 : vector<4x1xf32> to vector<4x256xf32>
    %25 = arith.mulf %2, %24 : vector<4x256xf32>
    %c0_16 = arith.constant 0 : index
    %c4 = arith.constant 4 : index
    %26 = vector.load %arg6[%c0_16, %c4] : memref<4x9xf32, #tpu.memory_space<vmem>>, vector<4x1xf32>
    %27 = vector.broadcast %26 : vector<4x1xf32> to vector<4x256xf32>
    %28 = arith.mulf %4, %27 : vector<4x256xf32>
    %29 = arith.addf %25, %28 : vector<4x256xf32>
    %c0_17 = arith.constant 0 : index
    %c512 = arith.constant 512 : index
    %30 = vector.load %arg10[%c0_17, %c512] : memref<4x1024xf32, #tpu.memory_space<vmem>>, vector<4x256xf32>
    tpu.vector_store %arg10[%c0_17, %c512], %29 {strides = array<i32>} : memref<4x1024xf32, #tpu.memory_space<vmem>>, vector<4x256xf32>,
    %c0_18 = arith.constant 0 : index
    %c5 = arith.constant 5 : index
    %31 = vector.load %arg6[%c0_18, %c5] : memref<4x9xf32, #tpu.memory_space<vmem>>, vector<4x1xf32>
    %32 = vector.broadcast %31 : vector<4x1xf32> to vector<4x256xf32>
    %33 = arith.mulf %2, %32 : vector<4x256xf32>
    %c0_19 = arith.constant 0 : index
    %c6 = arith.constant 6 : index
    %34 = vector.load %arg6[%c0_19, %c6] : memref<4x9xf32, #tpu.memory_space<vmem>>, vector<4x1xf32>
    %35 = vector.broadcast %34 : vector<4x1xf32> to vector<4x256xf32>
    %36 = arith.mulf %7, %35 : vector<4x256xf32>
    %37 = arith.addf %33, %36 : vector<4x256xf32>
    %c0_20 = arith.constant 0 : index
    %c7 = arith.constant 7 : index
    %38 = vector.load %arg6[%c0_20, %c7] : memref<4x9xf32, #tpu.memory_space<vmem>>, vector<4x1xf32>
    %39 = vector.broadcast %38 : vector<4x1xf32> to vector<4x256xf32>
    %40 = arith.mulf %4, %39 : vector<4x256xf32>
    %41 = arith.addf %37, %40 : vector<4x256xf32>
    %c0_21 = arith.constant 0 : index
    %c8 = arith.constant 8 : index
    %42 = vector.load %arg6[%c0_21, %c8] : memref<4x9xf32, #tpu.memory_space<vmem>>, vector<4x1xf32>
    %43 = vector.broadcast %42 : vector<4x1xf32> to vector<4x256xf32>
    %44 = arith.mulf %10, %43 : vector<4x256xf32>
    %45 = arith.addf %41, %44 : vector<4x256xf32>
    %c0_22 = arith.constant 0 : index
    %c768 = arith.constant 768 : index
    %46 = vector.load %arg10[%c0_22, %c768] : memref<4x1024xf32, #tpu.memory_space<vmem>>, vector<4x256xf32>
    tpu.vector_store %arg10[%c0_22, %c768], %45 {strides = array<i32>} : memref<4x1024xf32, #tpu.memory_space<vmem>>, vector<4x256xf32>,
    %c0_23 = arith.constant 0 : index
    %c0_24 = arith.constant 0 : index
    %47 = vector.load %arg7[%c0_23, %c0_24] : memref<8x4xf32, #tpu.memory_space<vmem>>, vector<8x4xf32>
    %c0_25 = arith.constant 0 : index
    %c0_26 = arith.constant 0 : index
    %48 = vector.load %arg10[%c0_25, %c0_26] : memref<4x1024xf32, #tpu.memory_space<vmem>>, vector<4x1024xf32>
    %cst = arith.constant dense<0.000000e+00> : vector<8x1024xf32>
    %49 = tpu.matmul %47, %48, %cst {dimension_numbers = #tpu.dot_dimension_numbers<[1], [0], [0], [1], [0, 0, 1, 1], [], []>} : vector<8x4xf32>, vector<4x1024xf32>, vector<8x1024xf32> -> vector<8x1024xf32>
    %c0_27 = arith.constant 0 : index
    %c0_28 = arith.constant 0 : index
    %c0_29 = arith.constant 0 : index
    %c0_30 = arith.constant 0 : index
    %50 = vector.load %arg8[%c0_27, %c0_28, %c0_29, %c0_30] : memref<1x1x8x1024xf32, #tpu.memory_space<vmem>>, vector<1x1x8x1024xf32>
    %51 = vector.shape_cast %50 : vector<1x1x8x1024xf32> to vector<8x1024xf32>
    %52 = vector.shape_cast %49 : vector<8x1024xf32> to vector<1x1x8x1024xf32>
    tpu.vector_store %arg8[%c0_27, %c0_28, %c0_29, %c0_30], %52 {strides = array<i32>} : memref<1x1x8x1024xf32, #tpu.memory_space<vmem>>, vector<1x1x8x1024xf32>,
    %cst_31 = arith.constant dense<0.000000e+00> : vector<8xf32>
    %53 = vector.multi_reduction <add>, %49, %cst_31 [1] : vector<8x1024xf32> to vector<8xf32>
    %54 = vector.shape_cast %53 : vector<8xf32> to vector<8x1xf32>
    %c0_32 = arith.constant 0 : index
    %c0_33 = arith.constant 0 : index
    %c0_34 = arith.constant 0 : index
    %c0_35 = arith.constant 0 : index
    %55 = vector.load %arg9[%c0_32, %c0_33, %c0_34, %c0_35] : memref<1x1x8x2xf32, #tpu.memory_space<vmem>>, vector<1x1x8x1xf32>
    %56 = vector.shape_cast %55 : vector<1x1x8x1xf32> to vector<8x1xf32>
    %57 = vector.shape_cast %54 : vector<8x1xf32> to vector<1x1x8x1xf32>
    tpu.vector_store %arg9[%c0_32, %c0_33, %c0_34, %c0_35], %57 {strides = array<i32>} : memref<1x1x8x2xf32, #tpu.memory_space<vmem>>, vector<1x1x8x1xf32>,
    %58 = arith.mulf %49, %49 : vector<8x1024xf32>
    %cst_36 = arith.constant dense<0.000000e+00> : vector<8xf32>
    %59 = vector.multi_reduction <add>, %58, %cst_36 [1] : vector<8x1024xf32> to vector<8xf32>
    %60 = vector.shape_cast %59 : vector<8xf32> to vector<8x1xf32>
    %c0_37 = arith.constant 0 : index
    %c0_38 = arith.constant 0 : index
    %c0_39 = arith.constant 0 : index
    %c1_40 = arith.constant 1 : index
    %61 = vector.load %arg9[%c0_37, %c0_38, %c0_39, %c1_40] : memref<1x1x8x2xf32, #tpu.memory_space<vmem>>, vector<1x1x8x1xf32>
    %62 = vector.shape_cast %61 : vector<1x1x8x1xf32> to vector<8x1xf32>
    %63 = vector.shape_cast %60 : vector<8x1xf32> to vector<1x1x8x1xf32>
    tpu.vector_store %arg9[%c0_37, %c0_38, %c0_39, %c1_40], %63 {strides = array<i32>} : memref<1x1x8x2xf32, #tpu.memory_space<vmem>>, vector<1x1x8x1xf32>,
    return
  }
  func.func @transform_0(%arg0: i32, %arg1: i32, %arg2: i32) -> (i32, i32, i32) {
    %c0_i32 = arith.constant 0 : i32
    %c0_i32_0 = arith.constant 0 : i32
    return %arg0, %c0_i32, %arg2 : i32, i32, i32
  }
  func.func @transform_1(%arg0: i32, %arg1: i32, %arg2: i32) -> (i32, i32, i32) {
    %c0_i32 = arith.constant 0 : i32
    %c0_i32_0 = arith.constant 0 : i32
    return %arg0, %c0_i32, %arg2 : i32, i32, i32
  }
  func.func @transform_2(%arg0: i32, %arg1: i32, %arg2: i32) -> (i32, i32) {
    %c0_i32 = arith.constant 0 : i32
    %c0_i32_0 = arith.constant 0 : i32
    %c0_i32_1 = arith.constant 0 : i32
    return %c0_i32, %c0_i32_0 : i32, i32
  }
  func.func @transform_3(%arg0: i32, %arg1: i32, %arg2: i32) -> (i32, i32) {
    %c0_i32 = arith.constant 0 : i32
    %c0_i32_0 = arith.constant 0 : i32
    %c0_i32_1 = arith.constant 0 : i32
    return %c0_i32, %c0_i32_0 : i32, i32
  }
  func.func @transform_4(%arg0: i32, %arg1: i32, %arg2: i32) -> (i32, i32) {
    %c0_i32 = arith.constant 0 : i32
    %c0_i32_0 = arith.constant 0 : i32
    return %arg1, %c0_i32 : i32, i32
  }
  func.func @transform_5(%arg0: i32, %arg1: i32, %arg2: i32) -> (i32, i32, i32, i32) {
    %c0_i32 = arith.constant 0 : i32
    %c0_i32_0 = arith.constant 0 : i32
    return %arg0, %arg2, %arg1, %c0_i32 : i32, i32, i32, i32
  }
  func.func @transform_6(%arg0: i32, %arg1: i32, %arg2: i32) -> (i32, i32, i32, i32) {
    %c0_i32 = arith.constant 0 : i32
    %c0_i32_0 = arith.constant 0 : i32
    return %arg0, %arg2, %arg1, %c0_i32 : i32, i32, i32, i32
  }
}

</mosaic_0001>

<llo_original>
// kernel: tpu_custom_call.1
$region0: #{tpu_custom_call.1}
  #allocation0 [shape = 'u32[]', space=smem, size = 0x4, offset = 0x4, fixed_abs, tag = 'smem constant byte address 0x4 - core index']
  #allocation1 [shape = 'u32[144,128]{1,0:T(1,128)}', space=vmem, size = 0x12000, scoped, tag = 'internal scratch']
  #allocation2 [shape = 'f32[4,1024]{1,0:T(4,128)}', space=vmem, size = 0x4000, scoped, tag = 'scratch operand']
  %s0 = inlined_call_operand.hbm [shape: f32[2,4,256], index: 0, kind: input, shape index: {}]
  %s1 = inlined_call_operand.hbm [shape: f32[2,4,256], index: 1, kind: input, shape index: {}]
  %s2 = inlined_call_operand.vmem [shape: f32[1,256], index: 2, kind: input, shape index: {}]
  %s3 = inlined_call_operand.vmem [shape: f32[4,9], index: 3, kind: input, shape index: {}]
  %s4 = inlined_call_operand.vmem [shape: f32[8,4], index: 4, kind: input, shape index: {}]
  %s5 = inlined_call_operand.hbm [shape: f32[2,1,8,1024], index: 5, kind: output, shape index: {0}]
  %s6 = inlined_call_operand.vmem [shape: f32[2,1,8,2], index: 6, kind: output, shape index: {1}]
  %7 = xla_tuple %s5, %s6
  %s8 = sld [smem:[#allocation0]]
  $region69: #{tpu_custom_call.1} parent=0
    _
  %s10 = ssub.s32 1, %s8
  %s11 = scalar_select 0, %s10, %s8
  $region1: #{tpu_custom_call.1} parent=0
    #allocation3 [shape = 'u8[8192]{0}', space=vmem, size = 0x2000, scoped, tag = 'input window, operand 0']
    #allocation4 [shape = 's32[2]{0}', space=sflag, size = 0x8, scoped, tag = 'scoped memory for tpu_custom_call.1']
    #allocation5 [shape = 's32[2]{0}', space=sflag, size = 0x8, scoped, tag = 'scoped memory for tpu_custom_call.1']
    #allocation6 [shape = 'u8[8192]{0}', space=vmem, size = 0x2000, scoped, tag = 'input window, operand 1']
    #allocation7 [shape = 's32[2]{0}', space=sflag, size = 0x8, scoped, tag = 'scoped memory for tpu_custom_call.1']
    #allocation8 [shape = 'u8[65536]{0}', space=vmem, size = 0x10000, scoped, tag = 'output window, operand 0']
    %12 = vsyncpa [#allocation4], 0
    %s13 = scalar_lea.sflag [#allocation4], 1
    %14 = vsyncpa %s13, 0
    %15 = vsyncpa [#allocation7], 0
    %s16 = scalar_lea.sflag [#allocation7], 1
    %17 = vsyncpa %s16, 0
    %18 = vsyncpa [#allocation5], 0
    %s19 = scalar_lea.sflag [#allocation5], 1
    %20 = vsyncpa %s19, 0
    loop: start=0, step=1, limit=4
    $region2: #{tpu_custom_call.1} parent=1 // loop_pre_header
      _
    $region3: #{tpu_custom_call.1} parent=1 // loop_header
      %s22 = sphi 0, %s26
      %p23 = scmp.ge.s32.totalorder %s22, 4
      %s29 = sphi 0, %s48
      %s30 = sphi 0, %s44
      %s31 = sphi 0, %s40
      %s32 = sphi 0, %s29
      %s33 = sphi 0, %s30
      %s34 = sphi 0, %s31
      %s35 = sphi 0, %s32
      %s36 = sphi 0, %s33
      %s37 = sphi 0, %s34
      %s53 = sphi 0, %s55
      %s56 = sphi 0, %s53
      %s57 = sphi 0, %s56
      %s73 = sphi 0, %s57
      %s81 = sphi 0, %s83
      %s84 = sphi 0, %s81
      %s85 = sphi 0, %s84
      %s101 = sphi 0, %s85
      %s105 = sphi 0, %s105
      %s107 = sphi 0, %s105
      %s108 = sphi 0, %s107
      %s122 = sphi 0, %s108
      %s126 = sphi 0, %s126
      %s128 = sphi 0, %s126
      %s129 = sphi 0, %s128
      %s143 = sphi 0, %s129
      %s149 = sphi 0, %s151
      %s152 = sphi 0, %s149
      %s153 = sphi 0, %s152
      %s169 = sphi 0, %s153
      %s179 = sphi 0, %s181
      %s182 = sphi 0, %s179
      %s183 = sphi 0, %s182
      %s199 = sphi 0, %s183
      %s209 = sphi 0, %s211
      %s212 = sphi 0, %s209
      %s213 = sphi 0, %s212
      %s229 = sphi 0, %s213
    $region4: #{tpu_custom_call.1} parent=1 // loop_header_branch
      %25 = sbr.rel (%p23) target = $region8
    $region5: #{tpu_custom_call.1} parent=1 // loop_body
      %s27 = ssub.s32 %s22, 1
      %s28 = ssub.s32 %s22, 2
      %s38 = sadd.s32 1, %s31
      %p39 = scmp.ge.s32.totalorder %s38, 1
      %s40 = scalar_select %p39, 0, %s38
      %s41 = sadd.s32 1, %s30
      %s42 = scalar_select %p39, %s41, %s30
      %p43 = scmp.ge.s32.totalorder %s42, 1
      %s44 = scalar_select %p43, 0, %s42
      %s45 = sadd.s32 1, %s29
      %s46 = scalar_select %p43, %s45, %s29
      %p47 = scmp.ge.s32.totalorder %s46, 2
      %s48 = scalar_select %p47, 0, %s46
      %s49 = ssub.s32 %s29, %s48
      %s50 = ssub.s32 %s31, %s40
      %s51 = sor.u32 %s49, %s50
      %p52 = scmp.eq.s32.totalorder %s51, 0
      %s54 = sadd.s32 %s53, 1
      %s55 = scalar_select %p52, %s53, %s54
      %p58 = pneg %p52
      %p59 = scmp.eq.s32.totalorder %s22, 1
      %p60 = por %p58, %p59
      %p61 = scmp.ne.s32.totalorder %s53, %s56
      %p62 = scmp.eq.s32.totalorder %s22, 0
      %p63 = por %p61, %p62
      %p64 = scmp.ne.s32.totalorder %s53, %s56
      %p65 = scmp.eq.s32.totalorder %s27, 1
      %p66 = por %p64, %p65
      %p67 = scmp.ne.s32.totalorder %s56, %s57
      %p68 = scmp.eq.s32.totalorder %s27, 0
      %p69 = por %p67, %p68
      %p70 = scmp.ne.s32.totalorder %s56, %s57
      %p71 = scmp.eq.s32.totalorder %s28, 1
      %p72 = por %p70, %p71
      %p74 = scmp.ne.s32.totalorder %s57, %s73
      %p75 = scmp.eq.s32.totalorder %s28, 0
      %p76 = por %p74, %p75
      %s77 = ssub.s32 %s29, %s48
      %s78 = ssub.s32 %s31, %s40
      %s79 = sor.u32 %s77, %s78
      %p80 = scmp.eq.s32.totalorder %s79, 0
      %s82 = sadd.s32 %s81, 1
      %s83 = scalar_select %p80, %s81, %s82
      %p86 = pneg %p80
      %p87 = scmp.eq.s32.totalorder %s22, 1
      %p88 = por %p86, %p87
      %p89 = scmp.ne.s32.totalorder %s81, %s84
      %p90 = scmp.eq.s32.totalorder %s22, 0
      %p91 = por %p89, %p90
      %p92 = scmp.ne.s32.totalorder %s81, %s84
      %p93 = scmp.eq.s32.totalorder %s27, 1
      %p94 = por %p92, %p93
      %p95 = scmp.ne.s32.totalorder %s84, %s85
      %p96 = scmp.eq.s32.totalorder %s27, 0
      %p97 = por %p95, %p96
      %p98 = scmp.ne.s32.totalorder %s84, %s85
      %p99 = scmp.eq.s32.totalorder %s28, 1
      %p100 = por %p98, %p99
      %p102 = scmp.ne.s32.totalorder %s85, %s101
      %p103 = scmp.eq.s32.totalorder %s28, 0
      %p104 = por %p102, %p103
      %s106 = sadd.s32 %s105, 1
      %p109 = scmp.eq.s32.totalorder %s22, 1
      %p110 = scmp.ne.s32.totalorder %s105, %s107
      %p111 = scmp.eq.s32.totalorder %s22, 0
      %p112 = por %p110, %p111
      %p113 = scmp.ne.s32.totalorder %s105, %s107
      %p114 = scmp.eq.s32.totalorder %s27, 1
      %p115 = por %p113, %p114
      %p116 = scmp.ne.s32.totalorder %s107, %s108
      %p117 = scmp.eq.s32.totalorder %s27, 0
      %p118 = por %p116, %p117
      %p119 = scmp.ne.s32.totalorder %s107, %s108
      %p120 = scmp.eq.s32.totalorder %s28, 1
      %p121 = por %p119, %p120
      %p123 = scmp.ne.s32.totalorder %s108, %s122
      %p124 = scmp.eq.s32.totalorder %s28, 0
      %p125 = por %p123, %p124
      %s127 = sadd.s32 %s126, 1
      %p130 = scmp.eq.s32.totalorder %s22, 1
      %p131 = scmp.ne.s32.totalorder %s126, %s128
      %p132 = scmp.eq.s32.totalorder %s22, 0
      %p133 = por %p131, %p132
      %p134 = scmp.ne.s32.totalorder %s126, %s128
      %p135 = scmp.eq.s32.totalorder %s27, 1
      %p136 = por %p134, %p135
      %p137 = scmp.ne.s32.totalorder %s128, %s129
      %p138 = scmp.eq.s32.totalorder %s27, 0
      %p139 = por %p137, %p138
      %p140 = scmp.ne.s32.totalorder %s128, %s129
      %p141 = scmp.eq.s32.totalorder %s28, 1
      %p142 = por %p140, %p141
      %p144 = scmp.ne.s32.totalorder %s129, %s143
      %p145 = scmp.eq.s32.totalorder %s28, 0
      %p146 = por %p144, %p145
      %s147 = ssub.s32 %s30, %s44
      %p148 = scmp.eq.s32.totalorder %s147, 0
      %s150 = sadd.s32 %s149, 1
      %s151 = scalar_select %p148, %s149, %s150
      %p154 = pneg %p148
      %p155 = scmp.eq.s32.totalorder %s22, 1
      %p156 = por %p154, %p155
      %p157 = scmp.ne.s32.totalorder %s149, %s152
      %p158 = scmp.eq.s32.totalorder %s22, 0
      %p159 = por %p157, %p158
      %p160 = scmp.ne.s32.totalorder %s149, %s152
      %p161 = scmp.eq.s32.totalorder %s27, 1
      %p162 = por %p160, %p161
      %p163 = scmp.ne.s32.totalorder %s152, %s153
      %p164 = scmp.eq.s32.totalorder %s27, 0
      %p165 = por %p163, %p164
      %p166 = scmp.ne.s32.totalorder %s152, %s153
      %p167 = scmp.eq.s32.totalorder %s28, 1
      %p168 = por %p166, %p167
      %p170 = scmp.ne.s32.totalorder %s153, %s169
      %p171 = scmp.eq.s32.totalorder %s28, 0
      %p172 = por %p170, %p171
      %s173 = ssub.s32 %s29, %s48
      %s174 = ssub.s32 %s31, %s40
      %s175 = sor.u32 %s173, %s174
      %s176 = ssub.s32 %s30, %s44
      %s177 = sor.u32 %s175, %s176
      %p178 = scmp.eq.s32.totalorder %s177, 0
      %s180 = sadd.s32 %s179, 1
      %s181 = scalar_select %p178, %s179, %s180
      %p184 = pneg %p178
      %p185 = scmp.eq.s32.totalorder %s22, 1
      %p186 = por %p184, %p185
      %p187 = scmp.ne.s32.totalorder %s179, %s182
      %p188 = scmp.eq.s32.totalorder %s22, 0
      %p189 = por %p187, %p188
      %p190 = scmp.ne.s32.totalorder %s179, %s182
      %p191 = scmp.eq.s32.totalorder %s27, 1
      %p192 = por %p190, %p191
      %p193 = scmp.ne.s32.totalorder %s182, %s183
      %p194 = scmp.eq.s32.totalorder %s27, 0
      %p195 = por %p193, %p194
      %p196 = scmp.ne.s32.totalorder %s182, %s183
      %p197 = scmp.eq.s32.totalorder %s28, 1
      %p198 = por %p196, %p197
      %p200 = scmp.ne.s32.totalorder %s183, %s199
      %p201 = scmp.eq.s32.totalorder %s28, 0
      %p202 = por %p200, %p201
      %s203 = ssub.s32 %s29, %s48
      %s204 = ssub.s32 %s31, %s40
      %s205 = sor.u32 %s203, %s204
      %s206 = ssub.s32 %s30, %s44
      %s207 = sor.u32 %s205, %s206
      %p208 = scmp.eq.s32.totalorder %s207, 0
      %s210 = sadd.s32 %s209, 1
      %s211 = scalar_select %p208, %s209, %s210
      %p214 = pneg %p208
      %p215 = scmp.eq.s32.totalorder %s22, 1
      %p216 = por %p214, %p215
      %p217 = scmp.ne.s32.totalorder %s209, %s212
      %p218 = scmp.eq.s32.totalorder %s22, 0
      %p219 = por %p217, %p218
      %p220 = scmp.ne.s32.totalorder %s209, %s212
      %p221 = scmp.eq.s32.totalorder %s27, 1
      %p222 = por %p220, %p221
      %p223 = scmp.ne.s32.totalorder %s212, %s213
      %p224 = scmp.eq.s32.totalorder %s27, 0
      %p225 = por %p223, %p224
      %p226 = scmp.ne.s32.totalorder %s212, %s213
      %p227 = scmp.eq.s32.totalorder %s28, 1
      %p228 = por %p226, %p227
      %p230 = scmp.ne.s32.totalorder %s213, %s229
      %p231 = scmp.eq.s32.totalorder %s28, 0
      %p232 = por %p230, %p231
      %p233 = scmp.le.s32.totalorder 1, %s22
      %p234 = scmp.lt.s32.totalorder %s22, 3
      %p235 = pnand %p233, %p234
      %p236 = pneg %p235
      // Predicated region
      $region9: #{tpu_custom_call.1} parent=5 // pred_check
        _
      $region10: #{tpu_custom_call.1} parent=5 // pred_check_branch
        %238 = sbr.rel (%p235) target = $region12
      $region11: #{tpu_custom_call.1} parent=5 // pred_region
        %s239 = ssub.s32 %s22, 1
        // Predicated region
        $region13: #{tpu_custom_call.1} parent=11 // pred_check
          %p240 = pneg %p118
        $region14: #{tpu_custom_call.1} parent=11 // pred_check_branch
          %242 = sbr.rel (%p240) target = $region16
        $region15: #{tpu_custom_call.1} parent=11 // pred_region
          _
        $region16: #{tpu_custom_call.1} parent=11 // pred_fallthru
          _
        // Predicated region
        $region17: #{tpu_custom_call.1} parent=11 // pred_check
          %p243 = pneg %p139
        $region18: #{tpu_custom_call.1} parent=11 // pred_check_branch
          %245 = sbr.rel (%p243) target = $region20
        $region19: #{tpu_custom_call.1} parent=11 // pred_region
          _
        $region20: #{tpu_custom_call.1} parent=11 // pred_fallthru
          _
        // Predicated region
        $region21: #{tpu_custom_call.1} parent=11 // pred_check
          %p246 = pneg %p165
        $region22: #{tpu_custom_call.1} parent=11 // pred_check_branch
          %248 = sbr.rel (%p246) target = $region24
        $region23: #{tpu_custom_call.1} parent=11 // pred_region
          %p249 = scmp.lt.s32.totalorder %s33, 0
          %s250 = scalar_select %p249, %s33, 0
          %s251 = smul.addr %s250, 8
          %s252 = scalar_lea.vmem %s4, %s251
        $region24: #{tpu_custom_call.1} parent=11 // pred_fallthru
          _
      $region12: #{tpu_custom_call.1} parent=5 // pred_fallthru
        _
      %p253 = scmp.lt.s32.totalorder %s22, 2
      // Predicated region
      $region25: #{tpu_custom_call.1} parent=5 // pred_check
        %p254 = pneg %p253
      $region26: #{tpu_custom_call.1} parent=5 // pred_check_branch
        %256 = sbr.rel (%p254) target = $region28
      $region27: #{tpu_custom_call.1} parent=5 // pred_region
        // Predicated region
        $region29: #{tpu_custom_call.1} parent=27 // pred_check
          %p257 = pneg %p63
        $region30: #{tpu_custom_call.1} parent=27 // pred_check_branch
          %259 = sbr.rel (%p257) target = $region32
        $region31: #{tpu_custom_call.1} parent=27 // pred_region
          %s260 = sand.u32 %s53, 1
          %s261 = scalar_lea.sflag [#allocation4], %s260
          %s262 = sand.u32 %s53, 1
          %s263 = smul.addr %s262, 8
          %s264 = scalar_lea.vmem [#allocation3], %s263
          %s265 = smul.u32 2, %s31
          %s267 = ssub.s32 128, 128
          %268 = vsyncadd %s261, %s267
          %s269 = smul.addr %s29, 2
          %s270 = sadd.s32 %s265, %s269
          %s271 = smul.addr %s270, 64
          %s272 = scalar_lea.hbm %s0, %s271
          %s274 = sshll.u32 %s264, 4
          %s275 = int_to_ptr.vmem [resolvable:$true] %s274
          %277 = dma.hbm_to_vmem [thread:$0]  %s272, 128, %s275, %s261
        $region32: #{tpu_custom_call.1} parent=27 // pred_fallthru
          _
        // Predicated region
        $region33: #{tpu_custom_call.1} parent=27 // pred_check
          %p278 = pneg %p91
        $region34: #{tpu_custom_call.1} parent=27 // pred_check_branch
          %280 = sbr.rel (%p278) target = $region36
        $region35: #{tpu_custom_call.1} parent=27 // pred_region
          %s281 = sand.u32 %s81, 1
          %s282 = scalar_lea.sflag [#allocation7], %s281
          %s283 = sand.u32 %s81, 1
          %s284 = smul.addr %s283, 8
          %s285 = scalar_lea.vmem [#allocation6], %s284
          %s286 = smul.u32 2, %s31
          %s288 = ssub.s32 128, 128
          %289 = vsyncadd %s282, %s288
          %s290 = smul.addr %s29, 2
          %s291 = sadd.s32 %s286, %s290
          %s292 = smul.addr %s291, 64
          %s293 = scalar_lea.hbm %s1, %s292
          %s295 = sshll.u32 %s285, 4
          %s296 = int_to_ptr.vmem [resolvable:$true] %s295
          %298 = dma.hbm_to_vmem [thread:$0]  %s293, 128, %s296, %s282
        $region36: #{tpu_custom_call.1} parent=27 // pred_fallthru
          _
      $region28: #{tpu_custom_call.1} parent=5 // pred_fallthru
        _
      %p299 = scmp.le.s32.totalorder 1, %s22
      %p300 = scmp.lt.s32.totalorder %s22, 3
      %p301 = pnand %p299, %p300
      %p302 = pneg %p301
      // Predicated region
      $region37: #{tpu_custom_call.1} parent=5 // pred_check
        _
      $region38: #{tpu_custom_call.1} parent=5 // pred_check_branch
        %304 = sbr.rel (%p301) target = $region40
      $region39: #{tpu_custom_call.1} parent=5 // pred_region
        %s305 = ssub.s32 %s22, 1
        %s306 = sand.u32 %s56, 1
        %s307 = scalar_lea.sflag [#allocation4], %s306
        %s308 = sand.u32 %s56, 1
        %s309 = smul.addr %s308, 8
        %s310 = scalar_lea.vmem [#allocation3], %s309
        // Predicated region
        $region41: #{tpu_custom_call.1} parent=39 // pred_check
          %p311 = pneg %p69
        $region42: #{tpu_custom_call.1} parent=39 // pred_check_branch
          %313 = sbr.rel (%p311) target = $region44
        $region43: #{tpu_custom_call.1} parent=39 // pred_region
          %314 = dma.done %s307, 128
        $region44: #{tpu_custom_call.1} parent=39 // pred_fallthru
          _
        %s315 = sand.u32 %s84, 1
        %s316 = scalar_lea.sflag [#allocation7], %s315
        %s317 = sand.u32 %s84, 1
        %s318 = smul.addr %s317, 8
        %s319 = scalar_lea.vmem [#allocation6], %s318
        // Predicated region
        $region45: #{tpu_custom_call.1} parent=39 // pred_check
          %p320 = pneg %p97
        $region46: #{tpu_custom_call.1} parent=39 // pred_check_branch
          %322 = sbr.rel (%p320) target = $region48
        $region47: #{tpu_custom_call.1} parent=39 // pred_region
          %323 = dma.done %s316, 128
        $region48: #{tpu_custom_call.1} parent=39 // pred_fallthru
          _
        %s324 = sand.u32 %s56, 1
        %s325 = scalar_lea.sflag [#allocation4], %s324
        %s326 = sand.u32 %s56, 1
        %s327 = smul.addr %s326, 8
        %s328 = scalar_lea.vmem [#allocation3], %s327
        %p329 = pneg %p69
        %p330 = pneg %p66
        %s331 = sand.u32 %s84, 1
        %s332 = scalar_lea.sflag [#allocation7], %s331
        %s333 = sand.u32 %s84, 1
        %s334 = smul.addr %s333, 8
        %s335 = scalar_lea.vmem [#allocation6], %s334
        %p336 = pneg %p97
        %p337 = pneg %p94
        %p338 = pneg %p118
        %p339 = pneg %p115
        %p340 = pneg %p139
        %p341 = pneg %p136
        %p342 = scmp.lt.s32.totalorder %s33, 0
        %s343 = scalar_select %p342, %s33, 0
        %s344 = smul.addr %s343, 8
        %s345 = scalar_lea.vmem %s4, %s344
        %p346 = pneg %p165
        %p347 = pneg %p162
        %p348 = pneg %p195
        %p349 = pneg %p192
        %s350 = sand.u32 %s182, 1
        %s351 = scalar_lea.sflag [#allocation5], %s350
        %s352 = sand.u32 %s182, 1
        %s353 = smul.addr %s352, 64
        %s354 = scalar_lea.vmem [#allocation8], %s353
        %p355 = pneg %p225
        %p356 = pneg %p222
        %p357 = scmp.lt.s32.totalorder %s32, 1
        %s358 = scalar_select %p357, %s32, 1
        %p359 = scmp.lt.s32.totalorder %s34, 0
        %s360 = scalar_select %p359, %s34, 0
        %p361 = scmp.lt.s32.totalorder %s33, 0
        %s362 = scalar_select %p361, %s33, 0
        %s363 = sadd.s32 %s362, %s360
        %s364 = sadd.s32 %s363, %s358
        %s365 = smul.addr %s364, 8
        %s366 = scalar_lea.vmem %s6, %s365
        %s367 = smul.u32 2, %s34
        %s368 = smul.u32 2, %s34
        %p369 = scmp.lt.s32.totalorder %s33, 0
        %s370 = scalar_select %p369, %s33, 0
        %s371 = smul.addr %s370, 8
        %s372 = scalar_lea.vmem %s4, %s371
        %p373 = scmp.lt.s32.totalorder %s32, 1
        %s374 = scalar_select %p373, %s32, 1
        %p375 = scmp.lt.s32.totalorder %s34, 0
        %s376 = scalar_select %p375, %s34, 0
        %p377 = scmp.lt.s32.totalorder %s33, 0
        %s378 = scalar_select %p377, %s33, 0
        %s379 = sadd.s32 %s378, %s376
        %s380 = sadd.s32 %s379, %s374
        %s381 = smul.addr %s380, 8
        %s382 = scalar_lea.vmem %s6, %s381
        %v383 = vld [vmem:[%s2] sm:$0x3]
        %v384 = vld [vmem:[%s310] sm:$0xff]
        %v385 = vld [vmem:[%s319] sm:$0xff]
        %v387 = vcombine.high %v384, %v384
        %389 = vrot.lane.b32.xlu0 %v384, 127
        %v390 = vpop.permute.xlu0 %389
        %391 = vrot.lane.b32.xlu0 %v387, 127
        %v392 = vpop.permute.xlu0 %391
        %v393 = vlaneseq
        %v394 = vand.u32 %v393, 127
        %vm395 = vcmp.lt.s32.totalorder %v394, 127
        %v396 = vsel %vm395, %v390, %v392
        %v397 = vsel %vm395, %v392, %v390
        %v399 = vlaneseq
        %v400 = vshrl.u32 %v399, 7
        %v401 = vsub.s32 0, %v400
        %v402 = vrot.slane %v383, %v401
        %v403 = vlaneseq
        %v404 = vshrl.u32 %v403, 7
        %v405 = vsub.s32 1, %v404
        %v406 = vrot.slane %v383, %v405
        %v409 = vmul.f32 %v396, %v402
        %v410 = vmul.f32 %v397, %v406
        %v412 = vcombine.high %v385, %v385
        %414 = vrot.lane.b32.xlu0 %v385, 127
        %v415 = vpop.permute.xlu0 %414
        %416 = vrot.lane.b32.xlu0 %v412, 127
        %v417 = vpop.permute.xlu0 %416
        %v418 = vsel %vm395, %v415, %v417
        %v419 = vsel %vm395, %v417, %v415
        %v420 = vmul.f32 %v418, %v402
        %v421 = vmul.f32 %v419, %v406
        %v422 = vld [vmem:[%s3] sm:$0xf]
        %424 = vset.pattern.permute.xlu0 0
        %425 = vperm.xlu0 %424, %v422
        %v426 = vpop.permute.xlu0 %425
        %v428 = vunpack.c.l.s4 839922192
        %v429 = vunpack.c.0.s8 %v428
        %v430 = vlaneseq
        %v431 = vshrl.u32 %v430, 7
        %v432 = vsub.s32 %v429, %v431
        %v433 = vrot.slane %v426, %v432
        %v435 = vmul.f32 %v384, %v433
        %436 = vst [vmem:[#allocation2] sm:$0xff] %v435
        %v437 = vld [vmem:[%s3] sm:$0xf]
        %439 = vset.pattern.permute.xlu0 1
        %440 = vperm.xlu0 %439, %v437
        %v441 = vpop.permute.xlu0 %440
        %v443 = vunpack.c.l.s4 839922192
        %v444 = vunpack.c.0.s8 %v443
        %v445 = vlaneseq
        %v446 = vshrl.u32 %v445, 7
        %v447 = vsub.s32 %v444, %v446
        %v448 = vrot.slane %v441, %v447
        %v450 = vmul.f32 %v384, %v448
        %451 = vset.pattern.permute.xlu0 2
        %452 = vperm.xlu0 %451, %v437
        %v453 = vpop.permute.xlu0 %452
        %v455 = vmul.f32 %v409, %v453
        %v456 = vmul.f32 %v410, %v453
        %v459 = vcombine.low %v455, %v456
        %v461 = vadd.f32 %v450, %v459
        %462 = vst [vmem:[#allocation2 + $0x8] sm:$0xff] %v461
        %v463 = vld [vmem:[%s3] sm:$0xf]
        %465 = vset.pattern.permute.xlu0 3
        %466 = vperm.xlu0 %465, %v463
        %v467 = vpop.permute.xlu0 %466
        %v469 = vunpack.c.l.s4 839922192
        %v470 = vunpack.c.0.s8 %v469
        %v471 = vlaneseq
        %v472 = vshrl.u32 %v471, 7
        %v473 = vsub.s32 %v470, %v472
        %v474 = vrot.slane %v467, %v473
        %v476 = vmul.f32 %v384, %v474
        %477 = vset.pattern.permute.xlu0 4
        %478 = vperm.xlu0 %477, %v463
        %v479 = vpop.permute.xlu0 %478
        %v481 = vunpack.c.l.s4 839922192
        %v482 = vunpack.c.0.s8 %v481
        %v483 = vlaneseq
        %v484 = vshrl.u32 %v483, 7
        %v485 = vsub.s32 %v482, %v484
        %v486 = vrot.slane %v479, %v485
        %v488 = vmul.f32 %v385, %v486
        %v489 = vadd.f32 %v476, %v488
        %490 = vst [vmem:[#allocation2 + $0x10] sm:$0xff] %v489
        %v491 = vld [vmem:[%s3] sm:$0xf]
        %493 = vset.pattern.permute.xlu0 5
        %494 = vperm.xlu0 %493, %v491
        %v495 = vpop.permute.xlu0 %494
        %v497 = vunpack.c.l.s4 839922192
        %v498 = vunpack.c.0.s8 %v497
        %v499 = vlaneseq
        %v500 = vshrl.u32 %v499, 7
        %v501 = vsub.s32 %v498, %v500
        %v502 = vrot.slane %v495, %v501
        %v504 = vmul.f32 %v384, %v502
        %505 = vset.pattern.permute.xlu0 6
        %506 = vperm.xlu0 %505, %v491
        %v507 = vpop.permute.xlu0 %506
        %v509 = vmul.f32 %v409, %v507
        %v510 = vmul.f32 %v410, %v507
        %v513 = vcombine.low %v509, %v510
        %v515 = vadd.f32 %v504, %v513
        %v516 = vld [vmem:[%s3] sm:$0xf]
        %518 = vset.pattern.permute.xlu0 7
        %519 = vperm.xlu0 %518, %v516
        %v520 = vpop.permute.xlu0 %519
        %v522 = vunpack.c.l.s4 839922192
        %v523 = vunpack.c.0.s8 %v522
        %v524 = vlaneseq
        %v525 = vshrl.u32 %v524, 7
        %v526 = vsub.s32 %v523, %v525
        %v527 = vrot.slane %v520, %v526
        %v529 = vmul.f32 %v385, %v527
        %v530 = vadd.f32 %v515, %v529
        %531 = vset.pattern.permute.xlu0 8
        %532 = vperm.xlu0 %531, %v516
        %v533 = vpop.permute.xlu0 %532
        %v535 = vmul.f32 %v420, %v533
        %v536 = vmul.f32 %v421, %v533
        %v539 = vcombine.low %v535, %v536
        %v541 = vadd.f32 %v530, %v539
        %542 = vst [vmem:[#allocation2 + $0x18] sm:$0xff] %v541
        %v543 = vld [vmem:[%s372] sm:$0xff]
        %v544 = vld [vmem:[#allocation2] sm:$0xff]
        %v545 = vld [vmem:[#allocation2 + $0x8] sm:$0xff]
        %v546 = vld [vmem:[#allocation2 + $0x10] sm:$0xff]
        %v547 = vld [vmem:[#allocation2 + $0x18] sm:$0xff]
        %v552 = vcombine.high %v544, %v544
        %v553 = vcombine.high %v545, %v545
        %v554 = vcombine.high %v546, %v546
        %v555 = vcombine.high %v547, %v547
        %vm556 = vcmask 31744
        %v558 = vsel %vm556, %v543, 0
        %vm560 = vcmask 1043456
        %v561 = vsel %vm560, %v544, 0
        %v563 = vsel %vm560, %v552, 0
        %v565 = vsel %vm560, %v545, 0
        %v567 = vsel %vm560, %v553, 0
        %v569 = vsel %vm560, %v546, 0
        %v571 = vsel %vm560, %v554, 0
        %v573 = vsel %vm560, %v547, 0
        %v575 = vsel %vm560, %v555, 0
        %577 = vmatprep.subr.mxu0 %v563
        %578 = vmatpush1.msra.mxu0 %v561
        %579 = vmatprep.subr.mxu0 0.0
        %580 = vmatpush1.msra.mxu0 0.0
        %581 = vmatprep.subr.mxu0 0.0
        %582 = vmatpush1.msra.mxu0 0.0
        %583 = vmatprep.subr.mxu0 0.0
        %584 = vmatpush1.msra.mxu0 0.0
        %585 = vmatprep.subr.mxu0 0.0
        %586 = vmatpush1.msra.mxu0 0.0
        %587 = vmatprep.subr.mxu0 0.0
        %588 = vmatpush1.msra.mxu0 0.0
        %589 = vmatprep.subr.mxu0 0.0
        %590 = vmatpush1.msra.mxu0 0.0
        %591 = vmatprep.subr.mxu0 0.0
        %592 = vmatpush1.msra.mxu0 0.0
        %593 = vmatprep.subr.mxu0 0.0
        %594 = vmatpush1.msra.mxu0 0.0
        %595 = vmatprep.subr.mxu0 0.0
        %596 = vmatpush1.msra.mxu0 0.0
        %597 = vmatprep.subr.mxu0 0.0
        %598 = vmatpush1.msra.mxu0 0.0
        %599 = vmatprep.subr.mxu0 0.0
        %600 = vmatpush1.msra.mxu0 0.0
        %601 = vmatprep.subr.mxu0 0.0
        %602 = vmatpush1.msra.mxu0 0.0
        %603 = vmatprep.subr.mxu0 0.0
        %604 = vmatpush1.msra.mxu0 0.0
        %605 = vmatprep.subr.mxu0 0.0
        %606 = vmatpush1.msra.mxu0 0.0
        %607 = vmatprep.subr.mxu0 0.0
        %608 = vmatpush1.msra.mxu0 0.0
        %609 = vmatprep.subr.mxu0 0.0
        %610 = vmatpush1.msra.mxu0 0.0
        %611 = vmatprep.subr.mxu0 0.0
        %612 = vmatpush1.msra.mxu0 0.0
        %613 = vmatprep.subr.mxu0 0.0
        %614 = vmatpush1.msra.mxu0 0.0
        %615 = vmatprep.subr.mxu0 0.0
        %616 = vmatpush1.msra.mxu0 0.0
        %617 = vmatprep.subr.mxu0 0.0
        %618 = vmatpush1.msra.mxu0 0.0
        %619 = vmatprep.subr.mxu0 0.0
        %620 = vmatpush1.msra.mxu0 0.0
        %621 = vmatprep.subr.mxu0 0.0
        %622 = vmatpush1.msra.mxu0 0.0
        %623 = vmatprep.subr.mxu0 0.0
        %624 = vmatpush1.msra.mxu0 0.0
        %625 = vmatprep.subr.mxu0 0.0
        %626 = vmatpush1.msra.mxu0 0.0
        %627 = vmatprep.subr.mxu0 0.0
        %628 = vmatpush1.msra.mxu0 0.0
        %629 = vmatprep.subr.mxu0 0.0
        %630 = vmatpush1.msra.mxu0 0.0
        %631 = vmatprep.subr.mxu0 0.0
        %632 = vmatpush1.msra.mxu0 0.0
        %633 = vmatprep.subr.mxu0 0.0
        %634 = vmatpush1.msra.mxu0 0.0
        %635 = vmatprep.subr.mxu0 0.0
        %636 = vmatpush1.msra.mxu0 0.0
        %637 = vmatprep.subr.mxu0 0.0
        %638 = vmatpush1.msra.mxu0 0.0
        %639 = vmatprep.subr.mxu0 0.0
        %640 = vmatpush1.msra.mxu0 0.0
        %641 = vmatprep.mubr.f32.mxu0 0.0
        %642 = vmatmul.mubr.f32.gmra.mrb[0].mxu0 %v558
        %v643 = vpop.f32.mrb[0].mxu0
        %v644 = vadd.f32 0.0, %v643
        %v645 = vpop.f32.mrb[0].mxu0
        %v646 = vadd.f32 0.0, %v645
        %647 = vdwg.mxu0
        %648 = vmatprep.subr.mxu0 %v567
        %649 = vmatpush1.msra.mxu0 %v565
        %650 = vmatprep.subr.mxu0 0.0
        %651 = vmatpush1.msra.mxu0 0.0
        %652 = vmatprep.subr.mxu0 0.0
        %653 = vmatpush1.msra.mxu0 0.0
        %654 = vmatprep.subr.mxu0 0.0
        %655 = vmatpush1.msra.mxu0 0.0
        %656 = vmatprep.subr.mxu0 0.0
        %657 = vmatpush1.msra.mxu0 0.0
        %658 = vmatprep.subr.mxu0 0.0
        %659 = vmatpush1.msra.mxu0 0.0
        %660 = vmatprep.subr.mxu0 0.0
        %661 = vmatpush1.msra.mxu0 0.0
        %662 = vmatprep.subr.mxu0 0.0
        %663 = vmatpush1.msra.mxu0 0.0
        %664 = vmatprep.subr.mxu0 0.0
        %665 = vmatpush1.msra.mxu0 0.0
        %666 = vmatprep.subr.mxu0 0.0
        %667 = vmatpush1.msra.mxu0 0.0
        %668 = vmatprep.subr.mxu0 0.0
        %669 = vmatpush1.msra.mxu0 0.0
        %670 = vmatprep.subr.mxu0 0.0
        %671 = vmatpush1.msra.mxu0 0.0
        %672 = vmatprep.subr.mxu0 0.0
        %673 = vmatpush1.msra.mxu0 0.0
        %674 = vmatprep.subr.mxu0 0.0
        %675 = vmatpush1.msra.mxu0 0.0
        %676 = vmatprep.subr.mxu0 0.0
        %677 = vmatpush1.msra.mxu0 0.0
        %678 = vmatprep.subr.mxu0 0.0
        %679 = vmatpush1.msra.mxu0 0.0
        %680 = vmatprep.subr.mxu0 0.0
        %681 = vmatpush1.msra.mxu0 0.0
        %682 = vmatprep.subr.mxu0 0.0
        %683 = vmatpush1.msra.mxu0 0.0
        %684 = vmatprep.subr.mxu0 0.0
        %685 = vmatpush1.msra.mxu0 0.0
        %686 = vmatprep.subr.mxu0 0.0
        %687 = vmatpush1.msra.mxu0 0.0
        %688 = vmatprep.subr.mxu0 0.0
        %689 = vmatpush1.msra.mxu0 0.0
        %690 = vmatprep.subr.mxu0 0.0
        %691 = vmatpush1.msra.mxu0 0.0
        %692 = vmatprep.subr.mxu0 0.0
        %693 = vmatpush1.msra.mxu0 0.0
        %694 = vmatprep.subr.mxu0 0.0
        %695 = vmatpush1.msra.mxu0 0.0
        %696 = vmatprep.subr.mxu0 0.0
        %697 = vmatpush1.msra.mxu0 0.0
        %698 = vmatprep.subr.mxu0 0.0
        %699 = vmatpush1.msra.mxu0 0.0
        %700 = vmatprep.subr.mxu0 0.0
        %701 = vmatpush1.msra.mxu0 0.0
        %702 = vmatprep.subr.mxu0 0.0
        %703 = vmatpush1.msra.mxu0 0.0
        %704 = vmatprep.subr.mxu0 0.0
        %705 = vmatpush1.msra.mxu0 0.0
        %706 = vmatprep.subr.mxu0 0.0
        %707 = vmatpush1.msra.mxu0 0.0
        %708 = vmatprep.subr.mxu0 0.0
        %709 = vmatpush1.msra.mxu0 0.0
        %710 = vmatprep.subr.mxu0 0.0
        %711 = vmatpush1.msra.mxu0 0.0
        %712 = vmatprep.mubr.f32.mxu0 0.0
        %713 = vmatmul.mubr.f32.gmra.mrb[0].mxu0 %v558
        %v714 = vpop.f32.mrb[0].mxu0
        %v715 = vadd.f32 0.0, %v714
        %v716 = vpop.f32.mrb[0].mxu0
        %v717 = vadd.f32 0.0, %v716
        %718 = vdwg.mxu0
        %719 = vmatprep.subr.mxu0 %v571
        %720 = vmatpush1.msra.mxu0 %v569
        %721 = vmatprep.subr.mxu0 0.0
        %722 = vmatpush1.msra.mxu0 0.0
        %723 = vmatprep.subr.mxu0 0.0
        %724 = vmatpush1.msra.mxu0 0.0
        %725 = vmatprep.subr.mxu0 0.0
        %726 = vmatpush1.msra.mxu0 0.0
        %727 = vmatprep.subr.mxu0 0.0
        %728 = vmatpush1.msra.mxu0 0.0
        %729 = vmatprep.subr.mxu0 0.0
        %730 = vmatpush1.msra.mxu0 0.0
        %731 = vmatprep.subr.mxu0 0.0
        %732 = vmatpush1.msra.mxu0 0.0
        %733 = vmatprep.subr.mxu0 0.0
        %734 = vmatpush1.msra.mxu0 0.0
        %735 = vmatprep.subr.mxu0 0.0
        %736 = vmatpush1.msra.mxu0 0.0
        %737 = vmatprep.subr.mxu0 0.0
        %738 = vmatpush1.msra.mxu0 0.0
        %739 = vmatprep.subr.mxu0 0.0
        %740 = vmatpush1.msra.mxu0 0.0
        %741 = vmatprep.subr.mxu0 0.0
        %742 = vmatpush1.msra.mxu0 0.0
        %743 = vmatprep.subr.mxu0 0.0
        %744 = vmatpush1.msra.mxu0 0.0
        %745 = vmatprep.subr.mxu0 0.0
        %746 = vmatpush1.msra.mxu0 0.0
        %747 = vmatprep.subr.mxu0 0.0
        %748 = vmatpush1.msra.mxu0 0.0
        %749 = vmatprep.subr.mxu0 0.0
        %750 = vmatpush1.msra.mxu0 0.0
        %751 = vmatprep.subr.mxu0 0.0
        %752 = vmatpush1.msra.mxu0 0.0
        %753 = vmatprep.subr.mxu0 0.0
        %754 = vmatpush1.msra.mxu0 0.0
        %755 = vmatprep.subr.mxu0 0.0
        %756 = vmatpush1.msra.mxu0 0.0
        %757 = vmatprep.subr.mxu0 0.0
        %758 = vmatpush1.msra.mxu0 0.0
        %759 = vmatprep.subr.mxu0 0.0
        %760 = vmatpush1.msra.mxu0 0.0
        %761 = vmatprep.subr.mxu0 0.0
        %762 = vmatpush1.msra.mxu0 0.0
        %763 = vmatprep.subr.mxu0 0.0
        %764 = vmatpush1.msra.mxu0 0.0
        %765 = vmatprep.subr.mxu0 0.0
        %766 = vmatpush1.msra.mxu0 0.0
        %767 = vmatprep.subr.mxu0 0.0
        %768 = vmatpush1.msra.mxu0 0.0
        %769 = vmatprep.subr.mxu0 0.0
        %770 = vmatpush1.msra.mxu0 0.0
        %771 = vmatprep.subr.mxu0 0.0
        %772 = vmatpush1.msra.mxu0 0.0
        %773 = vmatprep.subr.mxu0 0.0
        %774 = vmatpush1.msra.mxu0 0.0
        %775 = vmatprep.subr.mxu0 0.0
        %776 = vmatpush1.msra.mxu0 0.0
        %777 = vmatprep.subr.mxu0 0.0
        %778 = vmatpush1.msra.mxu0 0.0
        %779 = vmatprep.subr.mxu0 0.0
        %780 = vmatpush1.msra.mxu0 0.0
        %781 = vmatprep.subr.mxu0 0.0
        %782 = vmatpush1.msra.mxu0 0.0
        %783 = vmatprep.mubr.f32.mxu0 0.0
        %784 = vmatmul.mubr.f32.gmra.mrb[0].mxu0 %v558
        %v785 = vpop.f32.mrb[0].mxu0
        %v786 = vadd.f32 0.0, %v785
        %v787 = vpop.f32.mrb[0].mxu0
        %v788 = vadd.f32 0.0, %v787
        %789 = vdwg.mxu0
        %790 = vmatprep.subr.mxu0 %v575
        %791 = vmatpush1.msra.mxu0 %v573
        %792 = vmatprep.subr.mxu0 0.0
        %793 = vmatpush1.msra.mxu0 0.0
        %794 = vmatprep.subr.mxu0 0.0
        %795 = vmatpush1.msra.mxu0 0.0
        %796 = vmatprep.subr.mxu0 0.0
        %797 = vmatpush1.msra.mxu0 0.0
        %798 = vmatprep.subr.mxu0 0.0
        %799 = vmatpush1.msra.mxu0 0.0
        %800 = vmatprep.subr.mxu0 0.0
        %801 = vmatpush1.msra.mxu0 0.0
        %802 = vmatprep.subr.mxu0 0.0
        %803 = vmatpush1.msra.mxu0 0.0
        %804 = vmatprep.subr.mxu0 0.0
        %805 = vmatpush1.msra.mxu0 0.0
        %806 = vmatprep.subr.mxu0 0.0
        %807 = vmatpush1.msra.mxu0 0.0
        %808 = vmatprep.subr.mxu0 0.0
        %809 = vmatpush1.msra.mxu0 0.0
        %810 = vmatprep.subr.mxu0 0.0
        %811 = vmatpush1.msra.mxu0 0.0
        %812 = vmatprep.subr.mxu0 0.0
        %813 = vmatpush1.msra.mxu0 0.0
        %814 = vmatprep.subr.mxu0 0.0
        %815 = vmatpush1.msra.mxu0 0.0
        %816 = vmatprep.subr.mxu0 0.0
        %817 = vmatpush1.msra.mxu0 0.0
        %818 = vmatprep.subr.mxu0 0.0
        %819 = vmatpush1.msra.mxu0 0.0
        %820 = vmatprep.subr.mxu0 0.0
        %821 = vmatpush1.msra.mxu0 0.0
        %822 = vmatprep.subr.mxu0 0.0
        %823 = vmatpush1.msra.mxu0 0.0
        %824 = vmatprep.subr.mxu0 0.0
        %825 = vmatpush1.msra.mxu0 0.0
        %826 = vmatprep.subr.mxu0 0.0
        %827 = vmatpush1.msra.mxu0 0.0
        %828 = vmatprep.subr.mxu0 0.0
        %829 = vmatpush1.msra.mxu0 0.0
        %830 = vmatprep.subr.mxu0 0.0
        %831 = vmatpush1.msra.mxu0 0.0
        %832 = vmatprep.subr.mxu0 0.0
        %833 = vmatpush1.msra.mxu0 0.0
        %834 = vmatprep.subr.mxu0 0.0
        %835 = vmatpush1.msra.mxu0 0.0
        %836 = vmatprep.subr.mxu0 0.0
        %837 = vmatpush1.msra.mxu0 0.0
        %838 = vmatprep.subr.mxu0 0.0
        %839 = vmatpush1.msra.mxu0 0.0
        %840 = vmatprep.subr.mxu0 0.0
        %841 = vmatpush1.msra.mxu0 0.0
        %842 = vmatprep.subr.mxu0 0.0
        %843 = vmatpush1.msra.mxu0 0.0
        %844 = vmatprep.subr.mxu0 0.0
        %845 = vmatpush1.msra.mxu0 0.0
        %846 = vmatprep.subr.mxu0 0.0
        %847 = vmatpush1.msra.mxu0 0.0
        %848 = vmatprep.subr.mxu0 0.0
        %849 = vmatpush1.msra.mxu0 0.0
        %850 = vmatprep.subr.mxu0 0.0
        %851 = vmatpush1.msra.mxu0 0.0
        %852 = vmatprep.subr.mxu0 0.0
        %853 = vmatpush1.msra.mxu0 0.0
        %854 = vmatprep.mubr.f32.mxu0 0.0
        %855 = vmatmul.mubr.f32.gmra.mrb[0].mxu0 %v558
        %v856 = vpop.f32.mrb[0].mxu0
        %v857 = vadd.f32 0.0, %v856
        %v858 = vpop.f32.mrb[0].mxu0
        %v859 = vadd.f32 0.0, %v858
        %860 = vdwg.mxu0
        %861 = vst [vmem:[%s354] sm:$0xff] %v644
        %862 = vst [vmem:[%s354 + $0x8] sm:$0xff] %v646
        %863 = vst [vmem:[%s354 + $0x10] sm:$0xff] %v715
        %864 = vst [vmem:[%s354 + $0x18] sm:$0xff] %v717
        %865 = vst [vmem:[%s354 + $0x20] sm:$0xff] %v786
        %866 = vst [vmem:[%s354 + $0x28] sm:$0xff] %v788
        %867 = vst [vmem:[%s354 + $0x30] sm:$0xff] %v857
        %868 = vst [vmem:[%s354 + $0x38] sm:$0xff] %v859
        %v869 = vadd.f32 %v644, %v646
        %v870 = vadd.f32 %v869, %v715
        %v871 = vadd.f32 %v870, %v717
        %v872 = vadd.f32 %v871, %v786
        %v873 = vadd.f32 %v872, %v788
        %v874 = vadd.f32 %v873, %v857
        %v875 = vadd.f32 %v874, %v859
        %876 = vadd.xlane.f32.xlu0 %v875
        %v877 = vpop.xlane.xlu0 %876
        %vm878 = vcmask 7168
        %879 = vst.msk [vmem:[%s382] sm:$0xff] %vm878, %v877
        %v880 = vmul.f32 %v644, %v644
        %v881 = vmul.f32 %v646, %v646
        %v882 = vmul.f32 %v715, %v715
        %v883 = vmul.f32 %v717, %v717
        %v884 = vmul.f32 %v786, %v786
        %v885 = vmul.f32 %v788, %v788
        %v886 = vmul.f32 %v857, %v857
        %v887 = vmul.f32 %v859, %v859
        %v888 = vadd.f32 %v880, %v881
        %v889 = vadd.f32 %v888, %v882
        %v890 = vadd.f32 %v889, %v883
        %v891 = vadd.f32 %v890, %v884
        %v892 = vadd.f32 %v891, %v885
        %v893 = vadd.f32 %v892, %v886
        %v894 = vadd.f32 %v893, %v887
        %895 = vadd.xlane.f32.xlu0 %v894
        %v896 = vpop.xlane.xlu0 %895
        %vm897 = vcmask 15368
        %898 = vst.msk [vmem:[%s382] sm:$0xff] %vm897, %v896
        %s899 = sand.u32 %s182, 1
        %s900 = scalar_lea.sflag [#allocation5], %s899
        %s901 = sand.u32 %s182, 1
        %s902 = smul.addr %s901, 64
        %s903 = scalar_lea.vmem [#allocation8], %s902
        %p904 = scmp.lt.s32.totalorder %s32, 1
        %s905 = scalar_select %p904, %s32, 1
        %p906 = scmp.lt.s32.totalorder %s34, 0
        %s907 = scalar_select %p906, %s34, 0
        %p908 = scmp.lt.s32.totalorder %s33, 0
        %s909 = scalar_select %p908, %s33, 0
        %s910 = sadd.s32 %s909, %s907
        %s911 = sadd.s32 %s910, %s905
        %s912 = smul.addr %s911, 8
        %s913 = scalar_lea.vmem %s6, %s912
        // Predicated region
        $region49: #{tpu_custom_call.1} parent=39 // pred_check
          %p914 = pneg %p192
        $region50: #{tpu_custom_call.1} parent=39 // pred_check_branch
          %916 = sbr.rel (%p914) target = $region52
        $region51: #{tpu_custom_call.1} parent=39 // pred_region
          %s918 = ssub.s32 1024, 1024
          %919 = vsyncadd %s900, %s918
          %s920 = smul.addr %s33, 8
          %s921 = smul.addr %s34, 8
          %s922 = sadd.s32 %s920, %s921
          %s923 = smul.addr %s32, 8
          %s924 = sadd.s32 %s922, %s923
          %s925 = smul.addr %s924, 128
          %s926 = scalar_lea.hbm %s5, %s925
          %s928 = sshll.u32 %s903, 4
          %s929 = int_to_ptr.vmem [resolvable:$true] %s928
          %931 = dma.vmem_to_hbm [thread:$0]  %s929, 1024, %s926, %s900
        $region52: #{tpu_custom_call.1} parent=39 // pred_fallthru
          _
        // Predicated region
        $region53: #{tpu_custom_call.1} parent=39 // pred_check
          %p932 = pneg %p222
        $region54: #{tpu_custom_call.1} parent=39 // pred_check_branch
          %934 = sbr.rel (%p932) target = $region56
        $region55: #{tpu_custom_call.1} parent=39 // pred_region
          _
        $region56: #{tpu_custom_call.1} parent=39 // pred_fallthru
          _
      $region40: #{tpu_custom_call.1} parent=5 // pred_fallthru
        _
      %p935 = scmp.le.s32.totalorder 2, %s22
      // Predicated region
      $region57: #{tpu_custom_call.1} parent=5 // pred_check
        %p936 = pneg %p935
      $region58: #{tpu_custom_call.1} parent=5 // pred_check_branch
        %938 = sbr.rel (%p936) target = $region60
      $region59: #{tpu_custom_call.1} parent=5 // pred_region
        %s939 = ssub.s32 %s22, 2
        // Predicated region
        $region61: #{tpu_custom_call.1} parent=59 // pred_check
          %p940 = pneg %p198
        $region62: #{tpu_custom_call.1} parent=59 // pred_check_branch
          %942 = sbr.rel (%p940) target = $region64
        $region63: #{tpu_custom_call.1} parent=59 // pred_region
          %s943 = sand.u32 %s183, 1
          %s944 = scalar_lea.sflag [#allocation5], %s943
          %s945 = sand.u32 %s183, 1
          %s946 = smul.addr %s945, 64
          %s947 = scalar_lea.vmem [#allocation8], %s946
          %948 = dma.done %s944, 1024
        $region64: #{tpu_custom_call.1} parent=59 // pred_fallthru
          _
        // Predicated region
        $region65: #{tpu_custom_call.1} parent=59 // pred_check
          %p949 = pneg %p228
        $region66: #{tpu_custom_call.1} parent=59 // pred_check_branch
          %951 = sbr.rel (%p949) target = $region68
        $region67: #{tpu_custom_call.1} parent=59 // pred_region
          %p952 = scmp.lt.s32.totalorder %s35, 1
          %s953 = scalar_select %p952, %s35, 1
          %p954 = scmp.lt.s32.totalorder %s37, 0
          %s955 = scalar_select %p954, %s37, 0
          %p956 = scmp.lt.s32.totalorder %s36, 0
          %s957 = scalar_select %p956, %s36, 0
          %s958 = sadd.s32 %s957, %s955
          %s959 = sadd.s32 %s958, %s953
          %s960 = smul.addr %s959, 8
          %s961 = scalar_lea.vmem %s6, %s960
        $region68: #{tpu_custom_call.1} parent=59 // pred_fallthru
          _
      $region60: #{tpu_custom_call.1} parent=5 // pred_fallthru
        _
    $region6: #{tpu_custom_call.1} parent=1 // loop_footer
      %s26 = sadd.s32 1, %s22
    $region7: #{tpu_custom_call.1} parent=1 // loop_footer_branch
      %21 = sbr.rel target = $region3
    $region8: #{tpu_custom_call.1} parent=1 // loop_exit
      _
    %962 = vsyncpa [#allocation4], 1
    %s963 = scalar_lea.sflag [#allocation4], 1
    %964 = vsyncpa %s963, 1
    %965 = vsyncpa [#allocation7], 1
    %s966 = scalar_lea.sflag [#allocation7], 1
    %967 = vsyncpa %s966, 1
    %968 = vsyncpa [#allocation5], 1
    %s969 = scalar_lea.sflag [#allocation5], 1
    %970 = vsyncpa %s969, 1

</llo_original>
